<compile_context>
chip_gen: v5e
topology: v5e:2x2
jax: 0.10.0
libtpu: 0.0.40
codegen_flags: <defaults>
</compile_context>

<pallas_src>
import functools

import jax
import jax.numpy as jnp
from jax.experimental import pallas as pl
from jax.experimental.pallas import tpu as pltpu


EPS = 1e-5


def classifier_kernel(x_ref, w1_ref, b1_ref, w2_ref, b2_ref, o_ref):
    # x tile: (tile_n, D) f32.  Weight tiles have constant index_maps, so they
    # stay VMEM-resident across grid steps (no re-DMA).
    x = x_ref[...].astype(jnp.float32)

    # ---- InstanceNorm1d over the feature axis (per-row, biased variance) ----
    mean = jnp.mean(x, axis=-1, keepdims=True)                  # (tile_n, 1)
    centered = x - mean
    var = jnp.mean(centered * centered, axis=-1, keepdims=True)
    xn = centered * jax.lax.rsqrt(var + EPS)                    # (tile_n, D)

    # ---- Linear(D, E_pad) + ReLU (MXU in weight dtype, f32 accumulate) ----
    h = jnp.dot(xn.astype(w1_ref.dtype), w1_ref[...],
                preferred_element_type=jnp.float32)
    h = jnp.maximum(h + b1_ref[...], 0.0)                       # (tile_n, E_pad)

    # ---- Linear(E_pad, C) ----
    y = jnp.dot(h.astype(w2_ref.dtype), w2_ref[...],
                preferred_element_type=jnp.float32)
    o_ref[...] = (y + b2_ref[...]).astype(o_ref.dtype)          # (tile_n, C)


def prepare_params(w1, b1, w2, b2, *, use_bf16=True):
    """One-time parameter prep (hoisted out of the per-call path).

    Pads the hidden dim E to a multiple of 128 (lane-dense intermediate; the
    extra rows/cols are exactly zero so results are unchanged) and casts the
    MXU operands to bf16 (fast path) or keeps f32 (exact path).
    """
    d, e = w1.shape
    c = w2.shape[1]
    e_pad = max(128, pl.cdiv(e, 128) * 128)
    mm_dtype = jnp.bfloat16 if use_bf16 else jnp.float32
    w1p = jnp.zeros((d, e_pad), jnp.float32).at[:, :e].set(w1).astype(mm_dtype)
    b1p = jnp.zeros((1, e_pad), jnp.float32).at[:, :e].set(b1)
    w2p = jnp.zeros((e_pad, c), jnp.float32).at[:e, :].set(w2).astype(mm_dtype)
    b2p = jnp.reshape(b2, (1, c)).astype(jnp.float32)
    return w1p, b1p, w2p, b2p


@functools.partial(jax.jit, static_argnames=("tile_n",))
def classifier_forward(x, w1p, b1p, w2p, b2p, *, tile_n=8192):
    """x: (N, D) f32; padded params from `prepare_params`.  Returns (N, C) f32."""
    n, d = x.shape
    e_pad = w1p.shape[1]
    c = w2p.shape[1]

    # Block row count must be a multiple of 8; the grid need not divide N —
    # Pallas masks the tail block's reads/writes.
    tile_n = min(tile_n, ((n + 7) // 8) * 8)
    grid = (pl.cdiv(n, tile_n),)

    return pl.pallas_call(
        classifier_kernel,
        out_shape=jax.ShapeDtypeStruct((n, c), x.dtype),
        grid=grid,
        in_specs=[
            pl.BlockSpec((tile_n, d), lambda i: (i, 0)),        # x tile (pipelined)
            pl.BlockSpec((d, e_pad), lambda i: (0, 0)),         # w1 (resident)
            pl.BlockSpec((1, e_pad), lambda i: (0, 0)),         # b1 (resident)
            pl.BlockSpec((e_pad, c), lambda i: (0, 0)),         # w2 (resident)
            pl.BlockSpec((1, c), lambda i: (0, 0)),             # b2 (resident)
        ],
        out_specs=pl.BlockSpec((tile_n, c), lambda i: (i, 0)),  # exact-C output
        compiler_params=pltpu.CompilerParams(
            dimension_semantics=("parallel",),                  # megacore sharding
        ),
    )(x, w1p, b1p, w2p, b2p)


def init_params(key, input_dim, embed_dim, num_classes):
    """Deterministic init mimicking PyTorch nn.Linear default (uniform +/- 1/sqrt(fan_in))."""
    k1, k2, k3, k4 = jax.random.split(key, 4)
    bound1 = 1.0 / (input_dim ** 0.5)
    bound2 = 1.0 / (embed_dim ** 0.5)
    w1 = jax.random.uniform(k1, (input_dim, embed_dim), jnp.float32, -bound1, bound1)
    b1 = jax.random.uniform(k2, (1, embed_dim), jnp.float32, -bound1, bound1)
    w2 = jax.random.uniform(k3, (embed_dim, num_classes), jnp.float32, -bound2, bound2)
    b2 = jax.random.uniform(k4, (1, num_classes), jnp.float32, -bound2, bound2)
    return w1, b1, w2, b2


def reference_forward(x, w1, b1, w2, b2):
    mean = jnp.mean(x, axis=-1, keepdims=True)
    var = jnp.mean((x - mean) ** 2, axis=-1, keepdims=True)
    xn = (x - mean) / jnp.sqrt(var + EPS)
    h = jnp.maximum(xn @ w1 + b1, 0.0)
    return h @ w2 + b2


if __name__ == "__main__":
    # Small shapes consistent with the module's forward.
    batch = 8
    input_dim = 32
    classifier_embed_dim = 64
    num_classes = 10

    key = jax.random.PRNGKey(0)
    kx, kp = jax.random.split(key)
    x = jax.random.normal(kx, (batch, input_dim), dtype=jnp.float32)
    w1, b1, w2, b2 = init_params(kp, input_dim, classifier_embed_dim, num_classes)

    ref = reference_forward(x, w1, b1, w2, b2)

    # Exact-semantics path (f32 MXU operands): tight tolerance.
    params_f32 = prepare_params(w1, b1, w2, b2, use_bf16=False)
    out_f32 = jax.block_until_ready(classifier_forward(x, *params_f32))
    assert out_f32.shape == (batch, num_classes)
    assert jnp.allclose(out_f32, ref, atol=1e-4, rtol=1e-4), "f32 path mismatch"

    # Fast path (bf16 MXU operands, f32 accumulation): bf16-level tolerance.
    params_bf16 = prepare_params(w1, b1, w2, b2, use_bf16=True)
    out_bf16 = jax.block_until_ready(classifier_forward(x, *params_bf16))
    assert out_bf16.shape == (batch, num_classes)
    assert jnp.allclose(out_bf16, ref, atol=2e-2, rtol=2e-2), "bf16 path mismatch"

    # Non-divisible grid (tail-block masking) check: N=100 with tile_n=64 -> 2 steps,
    # second block partially out of bounds; valid rows must still be exact.
    n2 = 100
    x2 = jax.random.normal(jax.random.PRNGKey(1), (n2, input_dim), dtype=jnp.float32)
    ref2 = reference_forward(x2, w1, b1, w2, b2)
    out2 = jax.block_until_ready(classifier_forward(x2, *params_f32, tile_n=64))
    assert out2.shape == (n2, num_classes)
    assert jnp.allclose(out2, ref2, atol=1e-4, rtol=1e-4), "tail-block path mismatch"

    print("KERNEL_OK")
</pallas_src>

<mosaic_0001>
module attributes {stable_mosaic.version = 11 : i64} {
  func.func @classifier_kernel(%arg0: i32, %arg1: memref<8x32xf32, #tpu.memory_space<vmem>>, %arg2: memref<32x128xf32, #tpu.memory_space<vmem>>, %arg3: memref<1x128xf32, #tpu.memory_space<vmem>>, %arg4: memref<128x10xf32, #tpu.memory_space<vmem>>, %arg5: memref<1x10xf32, #tpu.memory_space<vmem>>, %arg6: memref<8x10xf32, #tpu.memory_space<vmem>>) attributes {dimension_semantics = [#tpu.dimension_semantics<parallel>], iteration_bounds = array<i64: 1>, scalar_prefetch = 0 : i64, scratch_operands = 0 : i64, tpu.core_type = #tpu.core_type<tc>, window_params = [{transform_indices = @transform_0, window_bounds = array<i64: 8, 32>}, {pipeline_mode = #tpu.pipeline_mode<synchronous>, transform_indices = @transform_1, window_bounds = array<i64: 32, 128>}, {pipeline_mode = #tpu.pipeline_mode<synchronous>, transform_indices = @transform_2, window_bounds = array<i64: 1, 128>}, {pipeline_mode = #tpu.pipeline_mode<synchronous>, transform_indices = @transform_3, window_bounds = array<i64: 128, 10>}, {pipeline_mode = #tpu.pipeline_mode<synchronous>, transform_indices = @transform_4, window_bounds = array<i64: 1, 10>}, {transform_indices = @transform_5, window_bounds = array<i64: 8, 10>}]} {
    %c0 = arith.constant 0 : index
    %c0_0 = arith.constant 0 : index
    %0 = vector.load %arg1[%c0, %c0_0] : memref<8x32xf32, #tpu.memory_space<vmem>>, vector<8x32xf32>
    %cst = arith.constant dense<0.000000e+00> : vector<8xf32>
    %1 = vector.multi_reduction <add>, %0, %cst [1] : vector<8x32xf32> to vector<8xf32>
    %2 = vector.shape_cast %1 : vector<8xf32> to vector<8x1xf32>
    %cst_1 = arith.constant 3.200000e+01 : f32
    %3 = vector.broadcast %cst_1 : f32 to vector<8x1xf32>
    %4 = arith.divf %2, %3 : vector<8x1xf32>
    %5 = vector.broadcast %4 : vector<8x1xf32> to vector<8x32xf32>
    %6 = arith.subf %0, %5 : vector<8x32xf32>
    %7 = arith.mulf %6, %6 : vector<8x32xf32>
    %cst_2 = arith.constant dense<0.000000e+00> : vector<8xf32>
    %8 = vector.multi_reduction <add>, %7, %cst_2 [1] : vector<8x32xf32> to vector<8xf32>
    %9 = vector.shape_cast %8 : vector<8xf32> to vector<8x1xf32>
    %cst_3 = arith.constant 3.200000e+01 : f32
    %10 = vector.broadcast %cst_3 : f32 to vector<8x1xf32>
    %11 = arith.divf %9, %10 : vector<8x1xf32>
    %cst_4 = arith.constant 9.99999974E-6 : f32
    %12 = vector.broadcast %cst_4 : f32 to vector<8x1xf32>
    %13 = arith.addf %11, %12 : vector<8x1xf32>
    %14 = math.rsqrt %13 : vector<8x1xf32>
    %15 = vector.broadcast %14 : vector<8x1xf32> to vector<8x32xf32>
    %16 = arith.mulf %6, %15 : vector<8x32xf32>
    %c0_5 = arith.constant 0 : index
    %c0_6 = arith.constant 0 : index
    %17 = vector.load %arg2[%c0_5, %c0_6] : memref<32x128xf32, #tpu.memory_space<vmem>>, vector<32x128xf32>
    %cst_7 = arith.constant dense<0.000000e+00> : vector<8x128xf32>
    %18 = tpu.matmul %16, %17, %cst_7 {dimension_numbers = #tpu.dot_dimension_numbers<[1], [0], [0], [1], [0, 0, 1, 1], [], []>} : vector<8x32xf32>, vector<32x128xf32>, vector<8x128xf32> -> vector<8x128xf32>
    %c0_8 = arith.constant 0 : index
    %c0_9 = arith.constant 0 : index
    %19 = vector.load %arg3[%c0_8, %c0_9] : memref<1x128xf32, #tpu.memory_space<vmem>>, vector<1x128xf32>
    %20 = vector.broadcast %19 : vector<1x128xf32> to vector<8x128xf32>
    %21 = arith.addf %18, %20 : vector<8x128xf32>
    %cst_10 = arith.constant 0.000000e+00 : f32
    %22 = vector.broadcast %cst_10 : f32 to vector<8x128xf32>
    %23 = arith.maximumf %21, %22 : vector<8x128xf32>
    %c0_11 = arith.constant 0 : index
    %c0_12 = arith.constant 0 : index
    %24 = vector.load %arg4[%c0_11, %c0_12] : memref<128x10xf32, #tpu.memory_space<vmem>>, vector<128x10xf32>
    %cst_13 = arith.constant dense<0.000000e+00> : vector<8x10xf32>
    %25 = tpu.matmul %23, %24, %cst_13 {dimension_numbers = #tpu.dot_dimension_numbers<[1], [0], [0], [1], [0, 0, 1, 1], [], []>} : vector<8x128xf32>, vector<128x10xf32>, vector<8x10xf32> -> vector<8x10xf32>
    %c0_14 = arith.constant 0 : index
    %c0_15 = arith.constant 0 : index
    %26 = vector.load %arg5[%c0_14, %c0_15] : memref<1x10xf32, #tpu.memory_space<vmem>>, vector<1x10xf32>
    %27 = vector.broadcast %26 : vector<1x10xf32> to vector<8x10xf32>
    %28 = arith.addf %25, %27 : vector<8x10xf32>
    %c0_16 = arith.constant 0 : index
    %c0_17 = arith.constant 0 : index
    %29 = vector.load %arg6[%c0_16, %c0_17] : memref<8x10xf32, #tpu.memory_space<vmem>>, vector<8x10xf32>
    tpu.vector_store %arg6[%c0_16, %c0_17], %28 {strides = array<i32>} : memref<8x10xf32, #tpu.memory_space<vmem>>, vector<8x10xf32>,
    return
  }
  func.func @transform_0(%arg0: i32) -> (i32, i32) {
    %c0_i32 = arith.constant 0 : i32
    %c0_i32_0 = arith.constant 0 : i32
    return %arg0, %c0_i32 : i32, i32
  }
  func.func @transform_1(%arg0: i32) -> (i32, i32) {
    %c0_i32 = arith.constant 0 : i32
    %c0_i32_0 = arith.constant 0 : i32
    %c0_i32_1 = arith.constant 0 : i32
    return %c0_i32, %c0_i32_0 : i32, i32
  }
  func.func @transform_2(%arg0: i32) -> (i32, i32) {
    %c0_i32 = arith.constant 0 : i32
    %c0_i32_0 = arith.constant 0 : i32
    %c0_i32_1 = arith.constant 0 : i32
    return %c0_i32, %c0_i32_0 : i32, i32
  }
  func.func @transform_3(%arg0: i32) -> (i32, i32) {
    %c0_i32 = arith.constant 0 : i32
    %c0_i32_0 = arith.constant 0 : i32
    %c0_i32_1 = arith.constant 0 : i32
    return %c0_i32, %c0_i32_0 : i32, i32
  }
  func.func @transform_4(%arg0: i32) -> (i32, i32) {
    %c0_i32 = arith.constant 0 : i32
    %c0_i32_0 = arith.constant 0 : i32
    %c0_i32_1 = arith.constant 0 : i32
    return %c0_i32, %c0_i32_0 : i32, i32
  }
  func.func @transform_5(%arg0: i32) -> (i32, i32) {
    %c0_i32 = arith.constant 0 : i32
    %c0_i32_0 = arith.constant 0 : i32
    return %arg0, %c0_i32 : i32, i32
  }
}

</mosaic_0001>

<llo_original>
// kernel: classifier_forward.1
$region0: #{classifier_forward.1}
  #allocation0 [shape = 'u32[]', space=smem, size = 0x4, offset = 0x4, fixed_abs, tag = 'smem constant byte address 0x4 - core index']
  #allocation1 [shape = 'u32[72,128]{1,0:T(1,128)}', space=vmem, size = 0x9000, scoped, tag = 'internal scratch']
  %s0 = inlined_call_operand.vmem [shape: f32[8,32], index: 0, kind: input, shape index: {}]
  %s1 = inlined_call_operand.vmem [shape: f32[32,128], index: 1, kind: input, shape index: {}]
  %s2 = inlined_call_operand.vmem [shape: f32[1,128], index: 2, kind: input, shape index: {}]
  %s3 = inlined_call_operand.vmem [shape: f32[128,10], index: 3, kind: input, shape index: {}]
  %s4 = inlined_call_operand.vmem [shape: f32[1,10], index: 4, kind: input, shape index: {}]
  %s5 = inlined_call_operand.hbm [shape: f32[8,10], index: 5, kind: output, shape index: {}]
  %s6 = sld [smem:[#allocation0]]
  $region30: #{classifier_forward.1} parent=0
    _
  %s8 = ssub.s32 1, %s6
  %s9 = scalar_select 0, %s8, %s6
  $region1: #{classifier_forward.1} parent=0
    #allocation2 [shape = 'u8[4096]{0}', space=vmem, size = 0x1000, scoped, tag = 'output window, operand 0, single buffered']
    #allocation3 [shape = 's32[1]{0}', space=sflag, size = 0x4, scoped, tag = 'scoped memory for classifier_forward.1']
    %10 = vsyncpa [#allocation3], 0
    // Predicated region
    $region2: #{classifier_forward.1} parent=1 // pred_check
      _
    $region3: #{classifier_forward.1} parent=1 // pred_check_branch
      %12 = sbr.rel (0) target = $region5
    $region4: #{classifier_forward.1} parent=1 // pred_region
      _
    $region5: #{classifier_forward.1} parent=1 // pred_fallthru
      _
    // Predicated region
    $region6: #{classifier_forward.1} parent=1 // pred_check
      _
    $region7: #{classifier_forward.1} parent=1 // pred_check_branch
      %14 = sbr.rel (0) target = $region9
    $region8: #{classifier_forward.1} parent=1 // pred_region
      _
    $region9: #{classifier_forward.1} parent=1 // pred_fallthru
      _
    // Predicated region
    $region10: #{classifier_forward.1} parent=1 // pred_check
      _
    $region11: #{classifier_forward.1} parent=1 // pred_check_branch
      %16 = sbr.rel (0) target = $region13
    $region12: #{classifier_forward.1} parent=1 // pred_region
      _
    $region13: #{classifier_forward.1} parent=1 // pred_fallthru
      _
    // Predicated region
    $region14: #{classifier_forward.1} parent=1 // pred_check
      _
    $region15: #{classifier_forward.1} parent=1 // pred_check_branch
      %18 = sbr.rel (0) target = $region17
    $region16: #{classifier_forward.1} parent=1 // pred_region
      _
    $region17: #{classifier_forward.1} parent=1 // pred_fallthru
      _
    // Predicated region
    $region18: #{classifier_forward.1} parent=1 // pred_check
      _
    $region19: #{classifier_forward.1} parent=1 // pred_check_branch
      %20 = sbr.rel (0) target = $region21
    $region20: #{classifier_forward.1} parent=1 // pred_region
      _
    $region21: #{classifier_forward.1} parent=1 // pred_fallthru
      _
    %v21 = vld [vmem:[%s0] sm:$0xff]
    %vm22 = vcmask 261120
    %v23 = vsel %vm22, %v21, 0.0
    %24 = vadd.xlane.f32.xlu0 %v23
    %v25 = vpop.xlane.xlu0 %24
    %v26 = vrcp.pop 32.0
    %v27 = vmul.f32 32.0, %v26
    %v28 = vsub.f32 1.0, %v27
    %v29 = vmul.f32 %v26, %v28
    %v30 = vadd.f32 %v26, %v29
    %vm31 = vweird.f32 %v26
    %v32 = vsel %vm31, %v26, %v30
    %v33 = vmul.f32 %v25, %v32
    %v34 = vsub.f32 %v21, %v33
    %v35 = vmul.f32 %v34, %v34
    %v36 = vsel %vm22, %v35, 0.0
    %37 = vadd.xlane.f32.xlu0 %v36
    %v38 = vpop.xlane.xlu0 %37
    %v39 = vmul.f32 %v38, %v32
    %v40 = vadd.f32 %v39, 1e-05
    %v41 = vrsqrt.pop %v40
    %v42 = vmul.f32 %v41, %v40
    %v43 = vmul.f32 %v42, %v41
    %v44 = vmul.f32 0.5, %v43
    %v45 = vsub.f32 1.5, %v44
    %v46 = vmul.f32 %v41, %v45
    %vm47 = vweird.f32 %v40
    %vm48 = vweird.f32 %v41
    %vm49 = vmor %vm47, %vm48
    %v50 = vsel %vm49, %v41, %v46
    %v51 = vmul.f32 %v34, %v50
    %v52 = vld [vmem:[%s1] sm:$0xff]
    %v53 = vld [vmem:[%s1 + $0x8] sm:$0xff]
    %v54 = vld [vmem:[%s1 + $0x10] sm:$0xff]
    %v55 = vld [vmem:[%s1 + $0x18] sm:$0xff]
    %v56 = vld [vmem:[%s2] sm:$0x1]
    %v58 = vperm.slane %v56, 0
    %v61 = vsel %vm22, %v51, 0
    %63 = vmatpush.msra.mxu0 0.0
    %64 = vmatpush.msra.mxu0 0.0
    %65 = vmatpush.msra.mxu0 0.0
    %66 = vmatpush.msra.mxu0 0.0
    %67 = vmatpush.msra.mxu0 0.0
    %68 = vmatpush.msra.mxu0 0.0
    %69 = vmatpush.msra.mxu0 0.0
    %70 = vmatpush.msra.mxu0 0.0
    %71 = vmatpush.msra.mxu0 0.0
    %72 = vmatpush.msra.mxu0 0.0
    %73 = vmatpush.msra.mxu0 0.0
    %74 = vmatpush.msra.mxu0 0.0
    %75 = vmatpush.msra.mxu0 %v55
    %76 = vmatpush.msra.mxu0 %v54
    %77 = vmatpush.msra.mxu0 %v53
    %78 = vmatpush.msra.mxu0 %v52
    %79 = vmatmul.f32.gmra.mxu0 %v61
    %v80 = vpop.f32.mrf.mxu0
    %v81 = vadd.f32 %v58, %v80
    %82 = vdwg.mxu0
    %v83 = vmax.f32 %v81, 0.0
    %v84 = vld [vmem:[%s3] sm:$0xff]
    %v85 = vld [vmem:[%s3 + $0x8] sm:$0xff]
    %v86 = vld [vmem:[%s3 + $0x10] sm:$0xff]
    %v87 = vld [vmem:[%s3 + $0x18] sm:$0xff]
    %v88 = vld [vmem:[%s3 + $0x20] sm:$0xff]
    %v89 = vld [vmem:[%s3 + $0x28] sm:$0xff]
    %v90 = vld [vmem:[%s3 + $0x30] sm:$0xff]
    %v91 = vld [vmem:[%s3 + $0x38] sm:$0xff]
    %v92 = vld [vmem:[%s3 + $0x40] sm:$0xff]
    %v93 = vld [vmem:[%s3 + $0x48] sm:$0xff]
    %v94 = vld [vmem:[%s3 + $0x50] sm:$0xff]
    %v95 = vld [vmem:[%s3 + $0x58] sm:$0xff]
    %v96 = vld [vmem:[%s3 + $0x60] sm:$0xff]
    %v97 = vld [vmem:[%s3 + $0x68] sm:$0xff]
    %v98 = vld [vmem:[%s3 + $0x70] sm:$0xff]
    %v99 = vld [vmem:[%s3 + $0x78] sm:$0xff]
    %v100 = vld [vmem:[%s4] sm:$0x1]
    %v102 = vperm.slane %v100, 0
    %104 = vmatpush.msra.mxu0 %v99
    %105 = vmatpush.msra.mxu0 %v98
    %106 = vmatpush.msra.mxu0 %v97
    %107 = vmatpush.msra.mxu0 %v96
    %108 = vmatpush.msra.mxu0 %v95
    %109 = vmatpush.msra.mxu0 %v94
    %110 = vmatpush.msra.mxu0 %v93
    %111 = vmatpush.msra.mxu0 %v92
    %112 = vmatpush.msra.mxu0 %v91
    %113 = vmatpush.msra.mxu0 %v90
    %114 = vmatpush.msra.mxu0 %v89
    %115 = vmatpush.msra.mxu0 %v88
    %116 = vmatpush.msra.mxu0 %v87
    %117 = vmatpush.msra.mxu0 %v86
    %118 = vmatpush.msra.mxu0 %v85
    %119 = vmatpush.msra.mxu0 %v84
    %120 = vmatmul.f32.gmra.mxu0 %v83
    %v121 = vpop.f32.mrf.mxu0
    %v122 = vadd.f32 %v102, %v121
    %123 = vdwg.mxu0
    %vm124 = vcmask 80896
    %125 = vst.msk [vmem:[#allocation2] sm:$0xff] %vm124, %v122
    // Predicated region
    $region22: #{classifier_forward.1} parent=1 // pred_check
      _
    $region23: #{classifier_forward.1} parent=1 // pred_check_branch
      %127 = sbr.rel (0) target = $region25
    $region24: #{classifier_forward.1} parent=1 // pred_region
      %129 = vsyncadd [#allocation3], 0
      %s131 = sshll.u32 [#allocation2], 4
      %s132 = int_to_ptr.vmem [resolvable:$true] %s131
      %s133 = sshll.u32 %s5, 4
      %s134 = int_to_ptr.hbm [resolvable:$true] %s133
      %136 = dma.vmem_to_hbm [thread:$0]  %s132, 128, %s134, [#allocation3]
    $region25: #{classifier_forward.1} parent=1 // pred_fallthru
      _
    // Predicated region
    $region26: #{classifier_forward.1} parent=1 // pred_check
      _
    $region27: #{classifier_forward.1} parent=1 // pred_check_branch
      %138 = sbr.rel (0) target = $region29
    $region28: #{classifier_forward.1} parent=1 // pred_region
      %140 = dma.done [#allocation3], 128
    $region29: #{classifier_forward.1} parent=1 // pred_fallthru
      _
    %141 = vsyncpa [#allocation3], 1

</llo_original>
